<compile_context>
chip_gen: v5e
topology: v5e:2x2
jax: 0.10.0
libtpu: 0.0.40
codegen_flags: <defaults>
</compile_context>

<pallas_src>
import math

import jax
import jax.numpy as jnp
from jax.experimental import pallas as pl
from jax.experimental.pallas import tpu as pltpu


def _round_up(v, m):
    return -(-v // m) * m


def lstm_fc_kernel(x_ref, wih_ref, whh_ref, b_ref, wfc_ref, bfc_ref,
                   h0_ref, c0_ref,
                   y_ref, hn_ref, cn_ref,
                   hs_sc):
    """Whole sequence in one invocation. Gate order (i, f, g, o), lane-fused.

    x_ref:   (seq*bp, in_dim)   time-major, batch padded to bp (multiple of 8)
    wih_ref: (in_dim, 4*hid)    whh_ref: (hid, 4*hid)   b_ref: (1, 4*hid)
    wfc_ref: (hid, out_pad)     bfc_ref: (1, out_pad)   (out_pad lane-dense)
    h0/c0:   (bp, hid)
    y_ref:   (seq*bp, out_pad)  hn/cn:   (bp, hid)
    hs_sc:   (seq*bp, hid)      VMEM slab of hidden states for the FC head
    """
    seq_bp, _ = x_ref.shape
    bp, hid = h0_ref.shape
    seq = seq_bp // bp

    # ---- Prologue: input projection for ALL steps in one MXU matmul. ----
    # Rows are already time-major and bp-aligned; no reshape needed.
    xproj = (jnp.dot(x_ref[...], wih_ref[...],
                     preferred_element_type=jnp.float32)
             + b_ref[...])                      # (seq*bp, 4*hid)

    w_hh = whh_ref[...]                          # held weight-stationary

    # ---- Serial recurrence (static trip count -> fully unrolled). ----
    h = h0_ref[...]                              # (bp, hid)
    c = c0_ref[...]                              # (bp, hid)
    for t in range(seq):
        r0 = t * bp                              # sublane-tile-aligned offset
        # Fused-gate matmul: (bp, hid) @ (hid, 4*hid) -> (bp, 4*hid)
        gates = xproj[r0:r0 + bp, :] + jnp.dot(
            h, w_hh, preferred_element_type=jnp.float32)
        # Two full-vreg EUP pushes instead of four partial-lane ones.
        sig = jax.nn.sigmoid(gates)
        th = jnp.tanh(gates)
        i = sig[:, 0 * hid:1 * hid]
        f = sig[:, 1 * hid:2 * hid]
        g = th[:, 2 * hid:3 * hid]
        o = sig[:, 3 * hid:4 * hid]
        c = f * c + i * g
        h = o * jnp.tanh(c)
        hs_sc[r0:r0 + bp, :] = h                 # aligned store, no relayout

    # Final hidden / cell state written exactly once.
    hn_ref[...] = h
    cn_ref[...] = c

    # ---- Batched FC + sigmoid head: one matmul, one lane-dense store. ----
    y = jax.nn.sigmoid(
        jnp.dot(hs_sc[...], wfc_ref[...], preferred_element_type=jnp.float32)
        + bfc_ref[...])
    y_ref[...] = y.astype(y_ref.dtype)


def lstm_forward(x, hidden, params):
    seq_len, batch, in_dim = x.shape
    hid = params["w_hh"].shape[0]
    out_dim = params["w_fc"].shape[-1]
    h0, c0 = hidden
    h0, c0 = h0[0], c0[0]                        # drop num_layers=1 dim

    bp = _round_up(max(batch, 8), 8)             # batch -> 8 sublanes
    out_pad = _round_up(out_dim, 128)            # FC output -> lane-dense

    # ---- Wrapper-side layout plumbing (free): pad + pre-flatten. ----
    x_p = jnp.pad(x, ((0, 0), (0, bp - batch), (0, 0)))
    x_p = x_p.reshape(seq_len * bp, in_dim)      # time-major, bp-aligned rows
    h0_p = jnp.pad(h0, ((0, bp - batch), (0, 0)))
    c0_p = jnp.pad(c0, ((0, bp - batch), (0, 0)))
    w_fc_p = jnp.pad(params["w_fc"], ((0, 0), (0, out_pad - out_dim)))
    b_fc_p = jnp.pad(params["b_fc"], ((0, 0), (0, out_pad - out_dim)))

    grid_spec = pltpu.PrefetchScalarGridSpec(
        num_scalar_prefetch=0,
        grid=(1,),
        in_specs=[
            pl.BlockSpec((seq_len * bp, in_dim), lambda i: (0, 0)),   # x (flat, padded)
            pl.BlockSpec((in_dim, 4 * hid), lambda i: (0, 0)),        # W_ih (lane-fused)
            pl.BlockSpec((hid, 4 * hid), lambda i: (0, 0)),           # W_hh
            pl.BlockSpec((1, 4 * hid), lambda i: (0, 0)),             # b_ih + b_hh
            pl.BlockSpec((hid, out_pad), lambda i: (0, 0)),           # W_fc (lane-dense)
            pl.BlockSpec((1, out_pad), lambda i: (0, 0)),             # b_fc
            pl.BlockSpec((bp, hid), lambda i: (0, 0)),                # h0
            pl.BlockSpec((bp, hid), lambda i: (0, 0)),                # c0
        ],
        out_specs=[
            pl.BlockSpec((seq_len * bp, out_pad), lambda i: (0, 0)),  # sigmoid(fc(h_t))
            pl.BlockSpec((bp, hid), lambda i: (0, 0)),                # h_n
            pl.BlockSpec((bp, hid), lambda i: (0, 0)),                # c_n
        ],
        scratch_shapes=[pltpu.VMEM((seq_len * bp, hid), jnp.float32)],  # hidden slab
    )

    y_p, h_n, c_n = pl.pallas_call(
        lstm_fc_kernel,
        out_shape=(
            jax.ShapeDtypeStruct((seq_len * bp, out_pad), jnp.float32),
            jax.ShapeDtypeStruct((bp, hid), jnp.float32),
            jax.ShapeDtypeStruct((bp, hid), jnp.float32),
        ),
        grid_spec=grid_spec,
        compiler_params=pltpu.CompilerParams(
            dimension_semantics=("arbitrary",)),
    )(x_p, params["w_ih"], params["w_hh"], params["b"], w_fc_p, b_fc_p,
      h0_p, c0_p)

    # Slice padding back off (wrapper-side, free). Row order matches
    # torch's out.contiguous().view(-1, hid_dim): time-major then batch.
    y = y_p.reshape(seq_len, bp, out_pad)[:, :batch, :out_dim]
    y = y.reshape(seq_len * batch, out_dim)
    return y, (h_n[:batch][None], c_n[:batch][None])


def lstm_ref(x, hidden, params):
    """Pure-JAX reference (matches torch.nn.LSTM + Linear + Sigmoid)."""
    h, c = hidden[0][0], hidden[1][0]
    hid = h.shape[-1]
    w_ih, w_hh, b = params["w_ih"], params["w_hh"], params["b"]

    def step(carry, x_t):
        h, c = carry
        gates = x_t @ w_ih + h @ w_hh + b[0]
        i = jax.nn.sigmoid(gates[:, :hid])
        f = jax.nn.sigmoid(gates[:, hid:2 * hid])
        g = jnp.tanh(gates[:, 2 * hid:3 * hid])
        o = jax.nn.sigmoid(gates[:, 3 * hid:])
        c = f * c + i * g
        h = o * jnp.tanh(c)
        return (h, c), h

    (h, c), hs = jax.lax.scan(step, (h, c), x)
    out = hs.reshape(-1, hid) @ params["w_fc"] + params["b_fc"]
    return jax.nn.sigmoid(out), (h[None], c[None])


if __name__ == "__main__":
    in_dim, hid_dim, num_lyrs, out_dim = 8, 32, 1, 5
    seq_len, batch = 8, 2

    key = jax.random.PRNGKey(0)
    ks = jax.random.split(key, 8)
    bound = 1.0 / math.sqrt(hid_dim)   # torch LSTM/Linear-style uniform init

    # Gates fused along the last (lane) axis in order (i, f, g, o).
    # NOTE: torch weight_ih_l0 / weight_hh_l0 are (4H, D); transpose to (D, 4H)
    # with gate order preserved when loading real checkpoints.
    params = {
        "w_ih": jax.random.uniform(ks[0], (in_dim, 4 * hid_dim), jnp.float32, -bound, bound),
        "w_hh": jax.random.uniform(ks[1], (hid_dim, 4 * hid_dim), jnp.float32, -bound, bound),
        "b":    jax.random.uniform(ks[2], (1, 4 * hid_dim), jnp.float32, -bound, bound),
        "w_fc": jax.random.uniform(ks[3], (hid_dim, out_dim), jnp.float32, -bound, bound),
        "b_fc": jax.random.uniform(ks[4], (1, out_dim), jnp.float32, -bound, bound),
    }
    x = jax.random.normal(ks[5], (seq_len, batch, in_dim), jnp.float32)
    h0 = jax.random.normal(ks[6], (num_lyrs, batch, hid_dim), jnp.float32)
    c0 = jax.random.normal(ks[7], (num_lyrs, batch, hid_dim), jnp.float32)

    out, (h_n, c_n) = lstm_forward(x, (h0, c0), params)
    jax.block_until_ready((out, h_n, c_n))

    out_ref, (h_ref, c_ref) = lstm_ref(x, (h0, c0), params)
    assert out.shape == (seq_len * batch, out_dim)
    assert h_n.shape == (num_lyrs, batch, hid_dim)
    assert jnp.allclose(out, out_ref, atol=1e-5), float(jnp.abs(out - out_ref).max())
    assert jnp.allclose(h_n, h_ref, atol=1e-5)
    assert jnp.allclose(c_n, c_ref, atol=1e-5)
    print("KERNEL_OK")
</pallas_src>

<mosaic_0001>
module attributes {stable_mosaic.version = 11 : i64} {
  func.func @lstm_fc_kernel(%arg0: i32, %arg1: memref<64x8xf32, #tpu.memory_space<vmem>>, %arg2: memref<8x128xf32, #tpu.memory_space<vmem>>, %arg3: memref<32x128xf32, #tpu.memory_space<vmem>>, %arg4: memref<1x128xf32, #tpu.memory_space<vmem>>, %arg5: memref<32x128xf32, #tpu.memory_space<vmem>>, %arg6: memref<1x128xf32, #tpu.memory_space<vmem>>, %arg7: memref<8x32xf32, #tpu.memory_space<vmem>>, %arg8: memref<8x32xf32, #tpu.memory_space<vmem>>, %arg9: memref<64x128xf32, #tpu.memory_space<vmem>>, %arg10: memref<8x32xf32, #tpu.memory_space<vmem>>, %arg11: memref<8x32xf32, #tpu.memory_space<vmem>>, %arg12: memref<64x32xf32, #tpu.memory_space<vmem>>) attributes {dimension_semantics = [#tpu.dimension_semantics<arbitrary>], iteration_bounds = array<i64: 1>, scalar_prefetch = 0 : i64, scratch_operands = 1 : i64, tpu.core_type = #tpu.core_type<tc>, window_params = [{pipeline_mode = #tpu.pipeline_mode<synchronous>, transform_indices = @transform_0, window_bounds = array<i64: 64, 8>}, {pipeline_mode = #tpu.pipeline_mode<synchronous>, transform_indices = @transform_1, window_bounds = array<i64: 8, 128>}, {pipeline_mode = #tpu.pipeline_mode<synchronous>, transform_indices = @transform_2, window_bounds = array<i64: 32, 128>}, {pipeline_mode = #tpu.pipeline_mode<synchronous>, transform_indices = @transform_3, window_bounds = array<i64: 1, 128>}, {pipeline_mode = #tpu.pipeline_mode<synchronous>, transform_indices = @transform_4, window_bounds = array<i64: 32, 128>}, {pipeline_mode = #tpu.pipeline_mode<synchronous>, transform_indices = @transform_5, window_bounds = array<i64: 1, 128>}, {pipeline_mode = #tpu.pipeline_mode<synchronous>, transform_indices = @transform_6, window_bounds = array<i64: 8, 32>}, {pipeline_mode = #tpu.pipeline_mode<synchronous>, transform_indices = @transform_7, window_bounds = array<i64: 8, 32>}, {pipeline_mode = #tpu.pipeline_mode<synchronous>, transform_indices = @transform_8, window_bounds = array<i64: 64, 128>}, {pipeline_mode = #tpu.pipeline_mode<synchronous>, transform_indices = @transform_9, window_bounds = array<i64: 8, 32>}, {pipeline_mode = #tpu.pipeline_mode<synchronous>, transform_indices = @transform_10, window_bounds = array<i64: 8, 32>}]} {
    %c0 = arith.constant 0 : index
    %c0_0 = arith.constant 0 : index
    %0 = vector.load %arg1[%c0, %c0_0] : memref<64x8xf32, #tpu.memory_space<vmem>>, vector<64x8xf32>
    %c0_1 = arith.constant 0 : index
    %c0_2 = arith.constant 0 : index
    %1 = vector.load %arg2[%c0_1, %c0_2] : memref<8x128xf32, #tpu.memory_space<vmem>>, vector<8x128xf32>
    %cst = arith.constant dense<0.000000e+00> : vector<64x128xf32>
    %2 = tpu.matmul %0, %1, %cst {dimension_numbers = #tpu.dot_dimension_numbers<[1], [0], [0], [1], [0, 0, 1, 1], [], []>} : vector<64x8xf32>, vector<8x128xf32>, vector<64x128xf32> -> vector<64x128xf32>
    %c0_3 = arith.constant 0 : index
    %c0_4 = arith.constant 0 : index
    %3 = vector.load %arg4[%c0_3, %c0_4] : memref<1x128xf32, #tpu.memory_space<vmem>>, vector<1x128xf32>
    %4 = vector.broadcast %3 : vector<1x128xf32> to vector<64x128xf32>
    %5 = arith.addf %2, %4 : vector<64x128xf32>
    %c0_5 = arith.constant 0 : index
    %c0_6 = arith.constant 0 : index
    %6 = vector.load %arg3[%c0_5, %c0_6] : memref<32x128xf32, #tpu.memory_space<vmem>>, vector<32x128xf32>
    %c0_7 = arith.constant 0 : index
    %c0_8 = arith.constant 0 : index
    %7 = vector.load %arg7[%c0_7, %c0_8] : memref<8x32xf32, #tpu.memory_space<vmem>>, vector<8x32xf32>
    %c0_9 = arith.constant 0 : index
    %c0_10 = arith.constant 0 : index
    %8 = vector.load %arg8[%c0_9, %c0_10] : memref<8x32xf32, #tpu.memory_space<vmem>>, vector<8x32xf32>
    %9 = vector.extract_strided_slice %5 {offsets = [0, 0], sizes = [8, 128], strides = [1, 1]} : vector<64x128xf32> to vector<8x128xf32>
    %cst_11 = arith.constant dense<0.000000e+00> : vector<8x128xf32>
    %10 = tpu.matmul %7, %6, %cst_11 {dimension_numbers = #tpu.dot_dimension_numbers<[1], [0], [0], [1], [0, 0, 1, 1], [], []>} : vector<8x32xf32>, vector<32x128xf32>, vector<8x128xf32> -> vector<8x128xf32>
    %11 = arith.addf %9, %10 : vector<8x128xf32>
    %12 = arith.negf %11 : vector<8x128xf32>
    %13 = math.exp %12 : vector<8x128xf32>
    %cst_12 = arith.constant 1.000000e+00 : f32
    %14 = vector.broadcast %cst_12 : f32 to vector<8x128xf32>
    %15 = arith.addf %14, %13 : vector<8x128xf32>
    %16 = arith.divf %14, %15 : vector<8x128xf32>
    %17 = math.tanh %11 : vector<8x128xf32>
    %18 = vector.extract_strided_slice %16 {offsets = [0, 0], sizes = [8, 32], strides = [1, 1]} : vector<8x128xf32> to vector<8x32xf32>
    %19 = vector.extract_strided_slice %16 {offsets = [0, 32], sizes = [8, 32], strides = [1, 1]} : vector<8x128xf32> to vector<8x32xf32>
    %20 = vector.extract_strided_slice %17 {offsets = [0, 64], sizes = [8, 32], strides = [1, 1]} : vector<8x128xf32> to vector<8x32xf32>
    %21 = vector.extract_strided_slice %16 {offsets = [0, 96], sizes = [8, 32], strides = [1, 1]} : vector<8x128xf32> to vector<8x32xf32>
    %22 = arith.mulf %19, %8 : vector<8x32xf32>
    %23 = arith.mulf %18, %20 : vector<8x32xf32>
    %24 = arith.addf %22, %23 : vector<8x32xf32>
    %25 = math.tanh %24 : vector<8x32xf32>
    %26 = arith.mulf %21, %25 : vector<8x32xf32>
    %c0_13 = arith.constant 0 : index
    %c0_14 = arith.constant 0 : index
    %27 = vector.load %arg12[%c0_13, %c0_14] : memref<64x32xf32, #tpu.memory_space<vmem>>, vector<8x32xf32>
    tpu.vector_store %arg12[%c0_13, %c0_14], %26 {strides = array<i32>} : memref<64x32xf32, #tpu.memory_space<vmem>>, vector<8x32xf32>,
    %28 = vector.extract_strided_slice %5 {offsets = [8, 0], sizes = [8, 128], strides = [1, 1]} : vector<64x128xf32> to vector<8x128xf32>
    %cst_15 = arith.constant dense<0.000000e+00> : vector<8x128xf32>
    %29 = tpu.matmul %26, %6, %cst_15 {dimension_numbers = #tpu.dot_dimension_numbers<[1], [0], [0], [1], [0, 0, 1, 1], [], []>} : vector<8x32xf32>, vector<32x128xf32>, vector<8x128xf32> -> vector<8x128xf32>
    %30 = arith.addf %28, %29 : vector<8x128xf32>
    %31 = arith.negf %30 : vector<8x128xf32>
    %32 = math.exp %31 : vector<8x128xf32>
    %cst_16 = arith.constant 1.000000e+00 : f32
    %33 = vector.broadcast %cst_16 : f32 to vector<8x128xf32>
    %34 = arith.addf %33, %32 : vector<8x128xf32>
    %35 = arith.divf %33, %34 : vector<8x128xf32>
    %36 = math.tanh %30 : vector<8x128xf32>
    %37 = vector.extract_strided_slice %35 {offsets = [0, 0], sizes = [8, 32], strides = [1, 1]} : vector<8x128xf32> to vector<8x32xf32>
    %38 = vector.extract_strided_slice %35 {offsets = [0, 32], sizes = [8, 32], strides = [1, 1]} : vector<8x128xf32> to vector<8x32xf32>
    %39 = vector.extract_strided_slice %36 {offsets = [0, 64], sizes = [8, 32], strides = [1, 1]} : vector<8x128xf32> to vector<8x32xf32>
    %40 = vector.extract_strided_slice %35 {offsets = [0, 96], sizes = [8, 32], strides = [1, 1]} : vector<8x128xf32> to vector<8x32xf32>
    %41 = arith.mulf %38, %24 : vector<8x32xf32>
    %42 = arith.mulf %37, %39 : vector<8x32xf32>
    %43 = arith.addf %41, %42 : vector<8x32xf32>
    %44 = math.tanh %43 : vector<8x32xf32>
    %45 = arith.mulf %40, %44 : vector<8x32xf32>
    %c8 = arith.constant 8 : index
    %c0_17 = arith.constant 0 : index
    %46 = vector.load %arg12[%c8, %c0_17] : memref<64x32xf32, #tpu.memory_space<vmem>>, vector<8x32xf32>
    tpu.vector_store %arg12[%c8, %c0_17], %45 {strides = array<i32>} : memref<64x32xf32, #tpu.memory_space<vmem>>, vector<8x32xf32>,
    %47 = vector.extract_strided_slice %5 {offsets = [16, 0], sizes = [8, 128], strides = [1, 1]} : vector<64x128xf32> to vector<8x128xf32>
    %cst_18 = arith.constant dense<0.000000e+00> : vector<8x128xf32>
    %48 = tpu.matmul %45, %6, %cst_18 {dimension_numbers = #tpu.dot_dimension_numbers<[1], [0], [0], [1], [0, 0, 1, 1], [], []>} : vector<8x32xf32>, vector<32x128xf32>, vector<8x128xf32> -> vector<8x128xf32>
    %49 = arith.addf %47, %48 : vector<8x128xf32>
    %50 = arith.negf %49 : vector<8x128xf32>
    %51 = math.exp %50 : vector<8x128xf32>
    %cst_19 = arith.constant 1.000000e+00 : f32
    %52 = vector.broadcast %cst_19 : f32 to vector<8x128xf32>
    %53 = arith.addf %52, %51 : vector<8x128xf32>
    %54 = arith.divf %52, %53 : vector<8x128xf32>
    %55 = math.tanh %49 : vector<8x128xf32>
    %56 = vector.extract_strided_slice %54 {offsets = [0, 0], sizes = [8, 32], strides = [1, 1]} : vector<8x128xf32> to vector<8x32xf32>
    %57 = vector.extract_strided_slice %54 {offsets = [0, 32], sizes = [8, 32], strides = [1, 1]} : vector<8x128xf32> to vector<8x32xf32>
    %58 = vector.extract_strided_slice %55 {offsets = [0, 64], sizes = [8, 32], strides = [1, 1]} : vector<8x128xf32> to vector<8x32xf32>
    %59 = vector.extract_strided_slice %54 {offsets = [0, 96], sizes = [8, 32], strides = [1, 1]} : vector<8x128xf32> to vector<8x32xf32>
    %60 = arith.mulf %57, %43 : vector<8x32xf32>
    %61 = arith.mulf %56, %58 : vector<8x32xf32>
    %62 = arith.addf %60, %61 : vector<8x32xf32>
    %63 = math.tanh %62 : vector<8x32xf32>
    %64 = arith.mulf %59, %63 : vector<8x32xf32>
    %c16 = arith.constant 16 : index
    %c0_20 = arith.constant 0 : index
    %65 = vector.load %arg12[%c16, %c0_20] : memref<64x32xf32, #tpu.memory_space<vmem>>, vector<8x32xf32>
    tpu.vector_store %arg12[%c16, %c0_20], %64 {strides = array<i32>} : memref<64x32xf32, #tpu.memory_space<vmem>>, vector<8x32xf32>,
    %66 = vector.extract_strided_slice %5 {offsets = [24, 0], sizes = [8, 128], strides = [1, 1]} : vector<64x128xf32> to vector<8x128xf32>
    %cst_21 = arith.constant dense<0.000000e+00> : vector<8x128xf32>
    %67 = tpu.matmul %64, %6, %cst_21 {dimension_numbers = #tpu.dot_dimension_numbers<[1], [0], [0], [1], [0, 0, 1, 1], [], []>} : vector<8x32xf32>, vector<32x128xf32>, vector<8x128xf32> -> vector<8x128xf32>
    %68 = arith.addf %66, %67 : vector<8x128xf32>
    %69 = arith.negf %68 : vector<8x128xf32>
    %70 = math.exp %69 : vector<8x128xf32>
    %cst_22 = arith.constant 1.000000e+00 : f32
    %71 = vector.broadcast %cst_22 : f32 to vector<8x128xf32>
    %72 = arith.addf %71, %70 : vector<8x128xf32>
    %73 = arith.divf %71, %72 : vector<8x128xf32>
    %74 = math.tanh %68 : vector<8x128xf32>
    %75 = vector.extract_strided_slice %73 {offsets = [0, 0], sizes = [8, 32], strides = [1, 1]} : vector<8x128xf32> to vector<8x32xf32>
    %76 = vector.extract_strided_slice %73 {offsets = [0, 32], sizes = [8, 32], strides = [1, 1]} : vector<8x128xf32> to vector<8x32xf32>
    %77 = vector.extract_strided_slice %74 {offsets = [0, 64], sizes = [8, 32], strides = [1, 1]} : vector<8x128xf32> to vector<8x32xf32>
    %78 = vector.extract_strided_slice %73 {offsets = [0, 96], sizes = [8, 32], strides = [1, 1]} : vector<8x128xf32> to vector<8x32xf32>
    %79 = arith.mulf %76, %62 : vector<8x32xf32>
    %80 = arith.mulf %75, %77 : vector<8x32xf32>
    %81 = arith.addf %79, %80 : vector<8x32xf32>
    %82 = math.tanh %81 : vector<8x32xf32>
    %83 = arith.mulf %78, %82 : vector<8x32xf32>
    %c24 = arith.constant 24 : index
    %c0_23 = arith.constant 0 : index
    %84 = vector.load %arg12[%c24, %c0_23] : memref<64x32xf32, #tpu.memory_space<vmem>>, vector<8x32xf32>
    tpu.vector_store %arg12[%c24, %c0_23], %83 {strides = array<i32>} : memref<64x32xf32, #tpu.memory_space<vmem>>, vector<8x32xf32>,
    %85 = vector.extract_strided_slice %5 {offsets = [32, 0], sizes = [8, 128], strides = [1, 1]} : vector<64x128xf32> to vector<8x128xf32>
    %cst_24 = arith.constant dense<0.000000e+00> : vector<8x128xf32>
    %86 = tpu.matmul %83, %6, %cst_24 {dimension_numbers = #tpu.dot_dimension_numbers<[1], [0], [0], [1], [0, 0, 1, 1], [], []>} : vector<8x32xf32>, vector<32x128xf32>, vector<8x128xf32> -> vector<8x128xf32>
    %87 = arith.addf %85, %86 : vector<8x128xf32>
    %88 = arith.negf %87 : vector<8x128xf32>
    %89 = math.exp %88 : vector<8x128xf32>
    %cst_25 = arith.constant 1.000000e+00 : f32
    %90 = vector.broadcast %cst_25 : f32 to vector<8x128xf32>
    %91 = arith.addf %90, %89 : vector<8x128xf32>
    %92 = arith.divf %90, %91 : vector<8x128xf32>
    %93 = math.tanh %87 : vector<8x128xf32>
    %94 = vector.extract_strided_slice %92 {offsets = [0, 0], sizes = [8, 32], strides = [1, 1]} : vector<8x128xf32> to vector<8x32xf32>
    %95 = vector.extract_strided_slice %92 {offsets = [0, 32], sizes = [8, 32], strides = [1, 1]} : vector<8x128xf32> to vector<8x32xf32>
    %96 = vector.extract_strided_slice %93 {offsets = [0, 64], sizes = [8, 32], strides = [1, 1]} : vector<8x128xf32> to vector<8x32xf32>
    %97 = vector.extract_strided_slice %92 {offsets = [0, 96], sizes = [8, 32], strides = [1, 1]} : vector<8x128xf32> to vector<8x32xf32>
    %98 = arith.mulf %95, %81 : vector<8x32xf32>
    %99 = arith.mulf %94, %96 : vector<8x32xf32>
    %100 = arith.addf %98, %99 : vector<8x32xf32>
    %101 = math.tanh %100 : vector<8x32xf32>
    %102 = arith.mulf %97, %101 : vector<8x32xf32>
    %c32 = arith.constant 32 : index
    %c0_26 = arith.constant 0 : index
    %103 = vector.load %arg12[%c32, %c0_26] : memref<64x32xf32, #tpu.memory_space<vmem>>, vector<8x32xf32>
    tpu.vector_store %arg12[%c32, %c0_26], %102 {strides = array<i32>} : memref<64x32xf32, #tpu.memory_space<vmem>>, vector<8x32xf32>,
    %104 = vector.extract_strided_slice %5 {offsets = [40, 0], sizes = [8, 128], strides = [1, 1]} : vector<64x128xf32> to vector<8x128xf32>
    %cst_27 = arith.constant dense<0.000000e+00> : vector<8x128xf32>
    %105 = tpu.matmul %102, %6, %cst_27 {dimension_numbers = #tpu.dot_dimension_numbers<[1], [0], [0], [1], [0, 0, 1, 1], [], []>} : vector<8x32xf32>, vector<32x128xf32>, vector<8x128xf32> -> vector<8x128xf32>
    %106 = arith.addf %104, %105 : vector<8x128xf32>
    %107 = arith.negf %106 : vector<8x128xf32>
    %108 = math.exp %107 : vector<8x128xf32>
    %cst_28 = arith.constant 1.000000e+00 : f32
    %109 = vector.broadcast %cst_28 : f32 to vector<8x128xf32>
    %110 = arith.addf %109, %108 : vector<8x128xf32>
    %111 = arith.divf %109, %110 : vector<8x128xf32>
    %112 = math.tanh %106 : vector<8x128xf32>
    %113 = vector.extract_strided_slice %111 {offsets = [0, 0], sizes = [8, 32], strides = [1, 1]} : vector<8x128xf32> to vector<8x32xf32>
    %114 = vector.extract_strided_slice %111 {offsets = [0, 32], sizes = [8, 32], strides = [1, 1]} : vector<8x128xf32> to vector<8x32xf32>
    %115 = vector.extract_strided_slice %112 {offsets = [0, 64], sizes = [8, 32], strides = [1, 1]} : vector<8x128xf32> to vector<8x32xf32>
    %116 = vector.extract_strided_slice %111 {offsets = [0, 96], sizes = [8, 32], strides = [1, 1]} : vector<8x128xf32> to vector<8x32xf32>
    %117 = arith.mulf %114, %100 : vector<8x32xf32>
    %118 = arith.mulf %113, %115 : vector<8x32xf32>
    %119 = arith.addf %117, %118 : vector<8x32xf32>
    %120 = math.tanh %119 : vector<8x32xf32>
    %121 = arith.mulf %116, %120 : vector<8x32xf32>
    %c40 = arith.constant 40 : index
    %c0_29 = arith.constant 0 : index
    %122 = vector.load %arg12[%c40, %c0_29] : memref<64x32xf32, #tpu.memory_space<vmem>>, vector<8x32xf32>
    tpu.vector_store %arg12[%c40, %c0_29], %121 {strides = array<i32>} : memref<64x32xf32, #tpu.memory_space<vmem>>, vector<8x32xf32>,
    %123 = vector.extract_strided_slice %5 {offsets = [48, 0], sizes = [8, 128], strides = [1, 1]} : vector<64x128xf32> to vector<8x128xf32>
    %cst_30 = arith.constant dense<0.000000e+00> : vector<8x128xf32>
    %124 = tpu.matmul %121, %6, %cst_30 {dimension_numbers = #tpu.dot_dimension_numbers<[1], [0], [0], [1], [0, 0, 1, 1], [], []>} : vector<8x32xf32>, vector<32x128xf32>, vector<8x128xf32> -> vector<8x128xf32>
    %125 = arith.addf %123, %124 : vector<8x128xf32>
    %126 = arith.negf %125 : vector<8x128xf32>
    %127 = math.exp %126 : vector<8x128xf32>
    %cst_31 = arith.constant 1.000000e+00 : f32
    %128 = vector.broadcast %cst_31 : f32 to vector<8x128xf32>
    %129 = arith.addf %128, %127 : vector<8x128xf32>
    %130 = arith.divf %128, %129 : vector<8x128xf32>
    %131 = math.tanh %125 : vector<8x128xf32>
    %132 = vector.extract_strided_slice %130 {offsets = [0, 0], sizes = [8, 32], strides = [1, 1]} : vector<8x128xf32> to vector<8x32xf32>
    %133 = vector.extract_strided_slice %130 {offsets = [0, 32], sizes = [8, 32], strides = [1, 1]} : vector<8x128xf32> to vector<8x32xf32>
    %134 = vector.extract_strided_slice %131 {offsets = [0, 64], sizes = [8, 32], strides = [1, 1]} : vector<8x128xf32> to vector<8x32xf32>
    %135 = vector.extract_strided_slice %130 {offsets = [0, 96], sizes = [8, 32], strides = [1, 1]} : vector<8x128xf32> to vector<8x32xf32>
    %136 = arith.mulf %133, %119 : vector<8x32xf32>
    %137 = arith.mulf %132, %134 : vector<8x32xf32>
    %138 = arith.addf %136, %137 : vector<8x32xf32>
    %139 = math.tanh %138 : vector<8x32xf32>
    %140 = arith.mulf %135, %139 : vector<8x32xf32>
    %c48 = arith.constant 48 : index
    %c0_32 = arith.constant 0 : index
    %141 = vector.load %arg12[%c48, %c0_32] : memref<64x32xf32, #tpu.memory_space<vmem>>, vector<8x32xf32>
    tpu.vector_store %arg12[%c48, %c0_32], %140 {strides = array<i32>} : memref<64x32xf32, #tpu.memory_space<vmem>>, vector<8x32xf32>,
    %142 = vector.extract_strided_slice %5 {offsets = [56, 0], sizes = [8, 128], strides = [1, 1]} : vector<64x128xf32> to vector<8x128xf32>
    %cst_33 = arith.constant dense<0.000000e+00> : vector<8x128xf32>
    %143 = tpu.matmul %140, %6, %cst_33 {dimension_numbers = #tpu.dot_dimension_numbers<[1], [0], [0], [1], [0, 0, 1, 1], [], []>} : vector<8x32xf32>, vector<32x128xf32>, vector<8x128xf32> -> vector<8x128xf32>
    %144 = arith.addf %142, %143 : vector<8x128xf32>
    %145 = arith.negf %144 : vector<8x128xf32>
    %146 = math.exp %145 : vector<8x128xf32>
    %cst_34 = arith.constant 1.000000e+00 : f32
    %147 = vector.broadcast %cst_34 : f32 to vector<8x128xf32>
    %148 = arith.addf %147, %146 : vector<8x128xf32>
    %149 = arith.divf %147, %148 : vector<8x128xf32>
    %150 = math.tanh %144 : vector<8x128xf32>
    %151 = vector.extract_strided_slice %149 {offsets = [0, 0], sizes = [8, 32], strides = [1, 1]} : vector<8x128xf32> to vector<8x32xf32>
    %152 = vector.extract_strided_slice %149 {offsets = [0, 32], sizes = [8, 32], strides = [1, 1]} : vector<8x128xf32> to vector<8x32xf32>
    %153 = vector.extract_strided_slice %150 {offsets = [0, 64], sizes = [8, 32], strides = [1, 1]} : vector<8x128xf32> to vector<8x32xf32>
    %154 = vector.extract_strided_slice %149 {offsets = [0, 96], sizes = [8, 32], strides = [1, 1]} : vector<8x128xf32> to vector<8x32xf32>
    %155 = arith.mulf %152, %138 : vector<8x32xf32>
    %156 = arith.mulf %151, %153 : vector<8x32xf32>
    %157 = arith.addf %155, %156 : vector<8x32xf32>
    %158 = math.tanh %157 : vector<8x32xf32>
    %159 = arith.mulf %154, %158 : vector<8x32xf32>
    %c56 = arith.constant 56 : index
    %c0_35 = arith.constant 0 : index
    %160 = vector.load %arg12[%c56, %c0_35] : memref<64x32xf32, #tpu.memory_space<vmem>>, vector<8x32xf32>
    tpu.vector_store %arg12[%c56, %c0_35], %159 {strides = array<i32>} : memref<64x32xf32, #tpu.memory_space<vmem>>, vector<8x32xf32>,
    %c0_36 = arith.constant 0 : index
    %c0_37 = arith.constant 0 : index
    %161 = vector.load %arg10[%c0_36, %c0_37] : memref<8x32xf32, #tpu.memory_space<vmem>>, vector<8x32xf32>
    tpu.vector_store %arg10[%c0_36, %c0_37], %159 {strides = array<i32>} : memref<8x32xf32, #tpu.memory_space<vmem>>, vector<8x32xf32>,
    %c0_38 = arith.constant 0 : index
    %c0_39 = arith.constant 0 : index
    %162 = vector.load %arg11[%c0_38, %c0_39] : memref<8x32xf32, #tpu.memory_space<vmem>>, vector<8x32xf32>
    tpu.vector_store %arg11[%c0_38, %c0_39], %157 {strides = array<i32>} : memref<8x32xf32, #tpu.memory_space<vmem>>, vector<8x32xf32>,
    %c0_40 = arith.constant 0 : index
    %c0_41 = arith.constant 0 : index
    %163 = vector.load %arg12[%c0_40, %c0_41] : memref<64x32xf32, #tpu.memory_space<vmem>>, vector<64x32xf32>
    %c0_42 = arith.constant 0 : index
    %c0_43 = arith.constant 0 : index
    %164 = vector.load %arg5[%c0_42, %c0_43] : memref<32x128xf32, #tpu.memory_space<vmem>>, vector<32x128xf32>
    %cst_44 = arith.constant dense<0.000000e+00> : vector<64x128xf32>
    %165 = tpu.matmul %163, %164, %cst_44 {dimension_numbers = #tpu.dot_dimension_numbers<[1], [0], [0], [1], [0, 0, 1, 1], [], []>} : vector<64x32xf32>, vector<32x128xf32>, vector<64x128xf32> -> vector<64x128xf32>
    %c0_45 = arith.constant 0 : index
    %c0_46 = arith.constant 0 : index
    %166 = vector.load %arg6[%c0_45, %c0_46] : memref<1x128xf32, #tpu.memory_space<vmem>>, vector<1x128xf32>
    %167 = vector.broadcast %166 : vector<1x128xf32> to vector<64x128xf32>
    %168 = arith.addf %165, %167 : vector<64x128xf32>
    %169 = arith.negf %168 : vector<64x128xf32>
    %170 = math.exp %169 : vector<64x128xf32>
    %cst_47 = arith.constant 1.000000e+00 : f32
    %171 = vector.broadcast %cst_47 : f32 to vector<64x128xf32>
    %172 = arith.addf %171, %170 : vector<64x128xf32>
    %173 = arith.divf %171, %172 : vector<64x128xf32>
    %c0_48 = arith.constant 0 : index
    %c0_49 = arith.constant 0 : index
    %174 = vector.load %arg9[%c0_48, %c0_49] : memref<64x128xf32, #tpu.memory_space<vmem>>, vector<64x128xf32>
    tpu.vector_store %arg9[%c0_48, %c0_49], %173 {strides = array<i32>} : memref<64x128xf32, #tpu.memory_space<vmem>>, vector<64x128xf32>,
    return
  }
  func.func @transform_0(%arg0: i32) -> (i32, i32) {
    %c0_i32 = arith.constant 0 : i32
    %c0_i32_0 = arith.constant 0 : i32
    %c0_i32_1 = arith.constant 0 : i32
    return %c0_i32, %c0_i32_0 : i32, i32
  }
  func.func @transform_1(%arg0: i32) -> (i32, i32) {
    %c0_i32 = arith.constant 0 : i32
    %c0_i32_0 = arith.constant 0 : i32
    %c0_i32_1 = arith.constant 0 : i32
    return %c0_i32, %c0_i32_0 : i32, i32
  }
  func.func @transform_2(%arg0: i32) -> (i32, i32) {
    %c0_i32 = arith.constant 0 : i32
    %c0_i32_0 = arith.constant 0 : i32
    %c0_i32_1 = arith.constant 0 : i32
    return %c0_i32, %c0_i32_0 : i32, i32
  }
  func.func @transform_3(%arg0: i32) -> (i32, i32) {
    %c0_i32 = arith.constant 0 : i32
    %c0_i32_0 = arith.constant 0 : i32
    %c0_i32_1 = arith.constant 0 : i32
    return %c0_i32, %c0_i32_0 : i32, i32
  }
  func.func @transform_4(%arg0: i32) -> (i32, i32) {
    %c0_i32 = arith.constant 0 : i32
    %c0_i32_0 = arith.constant 0 : i32
    %c0_i32_1 = arith.constant 0 : i32
    return %c0_i32, %c0_i32_0 : i32, i32
  }
  func.func @transform_5(%arg0: i32) -> (i32, i32) {
    %c0_i32 = arith.constant 0 : i32
    %c0_i32_0 = arith.constant 0 : i32
    %c0_i32_1 = arith.constant 0 : i32
    return %c0_i32, %c0_i32_0 : i32, i32
  }
  func.func @transform_6(%arg0: i32) -> (i32, i32) {
    %c0_i32 = arith.constant 0 : i32
    %c0_i32_0 = arith.constant 0 : i32
    %c0_i32_1 = arith.constant 0 : i32
    return %c0_i32, %c0_i32_0 : i32, i32
  }
  func.func @transform_7(%arg0: i32) -> (i32, i32) {
    %c0_i32 = arith.constant 0 : i32
    %c0_i32_0 = arith.constant 0 : i32
    %c0_i32_1 = arith.constant 0 : i32
    return %c0_i32, %c0_i32_0 : i32, i32
  }
  func.func @transform_8(%arg0: i32) -> (i32, i32) {
    %c0_i32 = arith.constant 0 : i32
    %c0_i32_0 = arith.constant 0 : i32
    %c0_i32_1 = arith.constant 0 : i32
    return %c0_i32, %c0_i32_0 : i32, i32
  }
  func.func @transform_9(%arg0: i32) -> (i32, i32) {
    %c0_i32 = arith.constant 0 : i32
    %c0_i32_0 = arith.constant 0 : i32
    %c0_i32_1 = arith.constant 0 : i32
    return %c0_i32, %c0_i32_0 : i32, i32
  }
  func.func @transform_10(%arg0: i32) -> (i32, i32) {
    %c0_i32 = arith.constant 0 : i32
    %c0_i32_0 = arith.constant 0 : i32
    %c0_i32_1 = arith.constant 0 : i32
    return %c0_i32, %c0_i32_0 : i32, i32
  }
}

</mosaic_0001>

<llo_original>
// kernel: tpu_custom_call.1
$region0: #{tpu_custom_call.1}
  #allocation0 [shape = 'u32[]', space=smem, size = 0x4, offset = 0x4, fixed_abs, tag = 'smem constant byte address 0x4 - core index']
  #allocation1 [shape = 'u32[72,128]{1,0:T(1,128)}', space=vmem, size = 0x9000, scoped, tag = 'internal scratch']
  #allocation2 [shape = 'f32[64,32]{1,0:T(8,128)}', space=vmem, size = 0x8000, scoped, tag = 'scratch operand']
  %s0 = inlined_call_operand.vmem [shape: f32[64,8], index: 0, kind: input, shape index: {}]
  %s1 = inlined_call_operand.vmem [shape: f32[8,128], index: 1, kind: input, shape index: {}]
  %s2 = inlined_call_operand.vmem [shape: f32[32,128], index: 2, kind: input, shape index: {}]
  %s3 = inlined_call_operand.vmem [shape: f32[1,128], index: 3, kind: input, shape index: {}]
  %s4 = inlined_call_operand.vmem [shape: f32[32,128], index: 4, kind: input, shape index: {}]
  %s5 = inlined_call_operand.vmem [shape: f32[1,128], index: 5, kind: input, shape index: {}]
  %s6 = inlined_call_operand.hbm [shape: f32[8,32], index: 6, kind: input, shape index: {}]
  %s7 = inlined_call_operand.hbm [shape: f32[8,32], index: 7, kind: input, shape index: {}]
  %s8 = inlined_call_operand.hbm [shape: f32[64,128], index: 8, kind: output, shape index: {0}]
  %s9 = inlined_call_operand.hbm [shape: f32[8,32], index: 9, kind: output, shape index: {1}]
  %s10 = inlined_call_operand.hbm [shape: f32[8,32], index: 10, kind: output, shape index: {2}]
  %11 = xla_tuple %s8, %s9, %s10
  %s12 = sld [smem:[#allocation0]]
  $region66: #{tpu_custom_call.1} parent=0
    _
  %s14 = ssub.s32 1, %s12
  %s15 = scalar_select 0, %s14, %s12
  $region1: #{tpu_custom_call.1} parent=0
    #allocation3 [shape = 'u8[4096]{0}', space=vmem, size = 0x1000, scoped, tag = 'input window, operand 6, single buffered']
    #allocation4 [shape = 's32[1]{0}', space=sflag, size = 0x4, scoped, tag = 'scoped memory for tpu_custom_call.1']
    #allocation5 [shape = 's32[1]{0}', space=sflag, size = 0x4, scoped, tag = 'scoped memory for tpu_custom_call.1']
    #allocation6 [shape = 'u8[4096]{0}', space=vmem, size = 0x1000, scoped, tag = 'input window, operand 7, single buffered']
    #allocation7 [shape = 's32[1]{0}', space=sflag, size = 0x4, scoped, tag = 'scoped memory for tpu_custom_call.1']
    #allocation8 [shape = 'u8[32768]{0}', space=vmem, size = 0x8000, scoped, tag = 'output window, operand 0, single buffered']
    #allocation9 [shape = 'u8[4096]{0}', space=vmem, size = 0x1000, scoped, tag = 'output window, operand 1, single buffered']
    #allocation10 [shape = 's32[1]{0}', space=sflag, size = 0x4, scoped, tag = 'scoped memory for tpu_custom_call.1']
    #allocation11 [shape = 'u8[4096]{0}', space=vmem, size = 0x1000, scoped, tag = 'output window, operand 2, single buffered']
    %16 = vsyncpa [#allocation4], 0
    %17 = vsyncpa [#allocation7], 0
    %18 = vsyncpa [#allocation5], 0
    %19 = vsyncpa [#allocation10], 0
    // Predicated region
    $region2: #{tpu_custom_call.1} parent=1 // pred_check
      _
    $region3: #{tpu_custom_call.1} parent=1 // pred_check_branch
      %21 = sbr.rel (0) target = $region5
    $region4: #{tpu_custom_call.1} parent=1 // pred_region
      _
    $region5: #{tpu_custom_call.1} parent=1 // pred_fallthru
      _
    // Predicated region
    $region6: #{tpu_custom_call.1} parent=1 // pred_check
      _
    $region7: #{tpu_custom_call.1} parent=1 // pred_check_branch
      %23 = sbr.rel (0) target = $region9
    $region8: #{tpu_custom_call.1} parent=1 // pred_region
      _
    $region9: #{tpu_custom_call.1} parent=1 // pred_fallthru
      _
    // Predicated region
    $region10: #{tpu_custom_call.1} parent=1 // pred_check
      _
    $region11: #{tpu_custom_call.1} parent=1 // pred_check_branch
      %25 = sbr.rel (0) target = $region13
    $region12: #{tpu_custom_call.1} parent=1 // pred_region
      _
    $region13: #{tpu_custom_call.1} parent=1 // pred_fallthru
      _
    // Predicated region
    $region14: #{tpu_custom_call.1} parent=1 // pred_check
      _
    $region15: #{tpu_custom_call.1} parent=1 // pred_check_branch
      %27 = sbr.rel (0) target = $region17
    $region16: #{tpu_custom_call.1} parent=1 // pred_region
      _
    $region17: #{tpu_custom_call.1} parent=1 // pred_fallthru
      _
    // Predicated region
    $region18: #{tpu_custom_call.1} parent=1 // pred_check
      _
    $region19: #{tpu_custom_call.1} parent=1 // pred_check_branch
      %29 = sbr.rel (0) target = $region21
    $region20: #{tpu_custom_call.1} parent=1 // pred_region
      _
    $region21: #{tpu_custom_call.1} parent=1 // pred_fallthru
      _
    // Predicated region
    $region22: #{tpu_custom_call.1} parent=1 // pred_check
      _
    $region23: #{tpu_custom_call.1} parent=1 // pred_check_branch
      %31 = sbr.rel (0) target = $region25
    $region24: #{tpu_custom_call.1} parent=1 // pred_region
      _
    $region25: #{tpu_custom_call.1} parent=1 // pred_fallthru
      _
    // Predicated region
    $region26: #{tpu_custom_call.1} parent=1 // pred_check
      _
    $region27: #{tpu_custom_call.1} parent=1 // pred_check_branch
      %33 = sbr.rel (0) target = $region29
    $region28: #{tpu_custom_call.1} parent=1 // pred_region
      %35 = vsyncadd [#allocation4], 0
      %s37 = sshll.u32 %s6, 4
      %s38 = int_to_ptr.hbm [resolvable:$true] %s37
      %s39 = sshll.u32 [#allocation3], 4
      %s40 = int_to_ptr.vmem [resolvable:$true] %s39
      %42 = dma.hbm_to_vmem [thread:$0]  %s38, 128, %s40, [#allocation4]
    $region29: #{tpu_custom_call.1} parent=1 // pred_fallthru
      _
    // Predicated region
    $region30: #{tpu_custom_call.1} parent=1 // pred_check
      _
    $region31: #{tpu_custom_call.1} parent=1 // pred_check_branch
      %44 = sbr.rel (0) target = $region33
    $region32: #{tpu_custom_call.1} parent=1 // pred_region
      %46 = vsyncadd [#allocation7], 0
      %s48 = sshll.u32 %s7, 4
      %s49 = int_to_ptr.hbm [resolvable:$true] %s48
      %s50 = sshll.u32 [#allocation6], 4
      %s51 = int_to_ptr.vmem [resolvable:$true] %s50
      %53 = dma.hbm_to_vmem [thread:$0]  %s49, 128, %s51, [#allocation7]
    $region33: #{tpu_custom_call.1} parent=1 // pred_fallthru
      _
    // Predicated region
    $region34: #{tpu_custom_call.1} parent=1 // pred_check
      _
    $region35: #{tpu_custom_call.1} parent=1 // pred_check_branch
      %55 = sbr.rel (0) target = $region37
    $region36: #{tpu_custom_call.1} parent=1 // pred_region
      %57 = dma.done [#allocation4], 128
    $region37: #{tpu_custom_call.1} parent=1 // pred_fallthru
      _
    // Predicated region
    $region38: #{tpu_custom_call.1} parent=1 // pred_check
      _
    $region39: #{tpu_custom_call.1} parent=1 // pred_check_branch
      %59 = sbr.rel (0) target = $region41
    $region40: #{tpu_custom_call.1} parent=1 // pred_region
      %61 = dma.done [#allocation7], 128
    $region41: #{tpu_custom_call.1} parent=1 // pred_fallthru
      _
    %v62 = vld [vmem:[%s0] sm:$0xff]
    %v63 = vld [vmem:[%s0 + $0x8] sm:$0xff]
    %v64 = vld [vmem:[%s0 + $0x10] sm:$0xff]
    %v65 = vld [vmem:[%s0 + $0x18] sm:$0xff]
    %v66 = vld [vmem:[%s0 + $0x20] sm:$0xff]
    %v67 = vld [vmem:[%s0 + $0x28] sm:$0xff]
    %v68 = vld [vmem:[%s0 + $0x30] sm:$0xff]
    %v69 = vld [vmem:[%s0 + $0x38] sm:$0xff]
    %v70 = vld [vmem:[%s1] sm:$0xff]
    %v71 = vld [vmem:[%s3] sm:$0x1]
    %v73 = vperm.slane %v71, 0
    %vm75 = vcmask 64512
    %v77 = vsel %vm75, %v62, 0
    %v80 = vsel %vm75, %v63, 0
    %v83 = vsel %vm75, %v64, 0
    %v86 = vsel %vm75, %v65, 0
    %v89 = vsel %vm75, %v66, 0
    %v92 = vsel %vm75, %v67, 0
    %v95 = vsel %vm75, %v68, 0
    %v98 = vsel %vm75, %v69, 0
    %100 = vmatpush.msra.mxu0 0.0
    %101 = vmatpush.msra.mxu0 0.0
    %102 = vmatpush.msra.mxu0 0.0
    %103 = vmatpush.msra.mxu0 0.0
    %104 = vmatpush.msra.mxu0 0.0
    %105 = vmatpush.msra.mxu0 0.0
    %106 = vmatpush.msra.mxu0 0.0
    %107 = vmatpush.msra.mxu0 0.0
    %108 = vmatpush.msra.mxu0 0.0
    %109 = vmatpush.msra.mxu0 0.0
    %110 = vmatpush.msra.mxu0 0.0
    %111 = vmatpush.msra.mxu0 0.0
    %112 = vmatpush.msra.mxu0 0.0
    %113 = vmatpush.msra.mxu0 0.0
    %114 = vmatpush.msra.mxu0 0.0
    %115 = vmatpush.msra.mxu0 %v70
    %116 = vmatmul.f32.gmra.mxu0 %v77
    %v117 = vpop.f32.mrf.mxu0
    %v118 = vadd.f32 %v73, %v117
    %119 = vmatmul.f32.gmra.mxu0 %v80
    %v120 = vpop.f32.mrf.mxu0
    %v121 = vadd.f32 %v73, %v120
    %122 = vmatmul.f32.gmra.mxu0 %v83
    %v123 = vpop.f32.mrf.mxu0
    %v124 = vadd.f32 %v73, %v123
    %125 = vmatmul.f32.gmra.mxu0 %v86
    %v126 = vpop.f32.mrf.mxu0
    %v127 = vadd.f32 %v73, %v126
    %128 = vmatmul.f32.gmra.mxu0 %v89
    %v129 = vpop.f32.mrf.mxu0
    %v130 = vadd.f32 %v73, %v129
    %131 = vmatmul.f32.gmra.mxu0 %v92
    %v132 = vpop.f32.mrf.mxu0
    %v133 = vadd.f32 %v73, %v132
    %134 = vmatmul.f32.gmra.mxu0 %v95
    %v135 = vpop.f32.mrf.mxu0
    %v136 = vadd.f32 %v73, %v135
    %137 = vmatmul.f32.gmra.mxu0 %v98
    %v138 = vpop.f32.mrf.mxu0
    %v139 = vadd.f32 %v73, %v138
    %140 = vdwg.mxu0
    %v141 = vld [vmem:[%s2] sm:$0xff]
    %v142 = vld [vmem:[%s2 + $0x8] sm:$0xff]
    %v143 = vld [vmem:[%s2 + $0x10] sm:$0xff]
    %v144 = vld [vmem:[%s2 + $0x18] sm:$0xff]
    %v145 = vld [vmem:[#allocation3] sm:$0xff]
    %v146 = vld [vmem:[#allocation6] sm:$0xff]
    %vm147 = vcmask 261120
    %v149 = vsel %vm147, %v145, 0
    %151 = vmatpush.msra.mxu0 0.0
    %152 = vmatpush.msra.mxu0 0.0
    %153 = vmatpush.msra.mxu0 0.0
    %154 = vmatpush.msra.mxu0 0.0
    %155 = vmatpush.msra.mxu0 0.0
    %156 = vmatpush.msra.mxu0 0.0
    %157 = vmatpush.msra.mxu0 0.0
    %158 = vmatpush.msra.mxu0 0.0
    %159 = vmatpush.msra.mxu0 0.0
    %160 = vmatpush.msra.mxu0 0.0
    %161 = vmatpush.msra.mxu0 0.0
    %162 = vmatpush.msra.mxu0 0.0
    %163 = vmatpush.msra.mxu0 %v144
    %164 = vmatpush.msra.mxu0 %v143
    %165 = vmatpush.msra.mxu0 %v142
    %166 = vmatpush.msra.mxu0 %v141
    %167 = vmatmul.f32.gmra.mxu0 %v149
    %v168 = vpop.f32.mrf.mxu0
    %v169 = vadd.f32 0.0, %v168
    %170 = vdwg.mxu0
    %v171 = vadd.f32 %v118, %v169
    %v172 = vxor.u32 %v171, 2147483648
    %v173 = vmul.f32 %v172, 1.442695
    %v174 = vpow.pop %v173
    %v175 = vadd.f32 %v174, 1.0
    %v176 = vrcp.pop %v175
    %v177 = vmul.f32 %v175, %v176
    %v178 = vsub.f32 1.0, %v177
    %v179 = vmul.f32 %v176, %v178
    %v180 = vadd.f32 %v176, %v179
    %vm181 = vweird.f32 %v175
    %vm182 = vweird.f32 %v176
    %vm183 = vmor %vm181, %vm182
    %v184 = vsel %vm183, %v176, %v180
    %v185 = vand.u32 2147483647, %v175
    %vm186 = vcmp.eq.f32.partialorder %v185, 8.507059e+37
    %v187 = vand.u32 %v175, 2147483648
    %v188 = vor.u32 1.1754944e-38, %v187
    %v189 = vsel %vm186, %v188, %v184
    %v190 = vmul.f32 1.0, %v189
    %v191 = vtanh.pop %v171
    %193 = vrot.lane.b32.xlu0 %v146, 32
    %v194 = vpop.permute.xlu0 %193
    %v196 = vmul.f32 %v190, %v194
    %198 = vrot.lane.b32.xlu0 %v191, 64
    %v199 = vpop.permute.xlu0 %198
    %v201 = vmul.f32 %v190, %v199
    %203 = vrot.lane.b32.xlu0 %v201, 32
    %v204 = vpop.permute.xlu0 %203
    %v206 = vadd.f32 %v196, %v204
    %v207 = vtanh.pop %v206
    %209 = vrot.lane.b32.xlu0 %v207, 64
    %v210 = vpop.permute.xlu0 %209
    %v212 = vmul.f32 %v190, %v210
    %214 = vrot.lane.b32.xlu0 %v212, 32
    %v215 = vpop.permute.xlu0 %214
    %217 = vst.msk [vmem:[#allocation2] sm:$0xff] %vm147, %v215
    %v218 = vsel %vm147, %v215, 0
    %220 = vmatpush.msra.mxu0 0.0
    %221 = vmatpush.msra.mxu0 0.0
    %222 = vmatpush.msra.mxu0 0.0
    %223 = vmatpush.msra.mxu0 0.0
    %224 = vmatpush.msra.mxu0 0.0
    %225 = vmatpush.msra.mxu0 0.0
    %226 = vmatpush.msra.mxu0 0.0
    %227 = vmatpush.msra.mxu0 0.0
    %228 = vmatpush.msra.mxu0 0.0
    %229 = vmatpush.msra.mxu0 0.0
    %230 = vmatpush.msra.mxu0 0.0
    %231 = vmatpush.msra.mxu0 0.0
    %232 = vmatpush.msra.mxu0 %v144
    %233 = vmatpush.msra.mxu0 %v143
    %234 = vmatpush.msra.mxu0 %v142
    %235 = vmatpush.msra.mxu0 %v141
    %236 = vmatmul.f32.gmra.mxu0 %v218
    %v237 = vpop.f32.mrf.mxu0
    %v238 = vadd.f32 0.0, %v237
    %239 = vdwg.mxu0
    %v240 = vadd.f32 %v121, %v238
    %v241 = vxor.u32 %v240, 2147483648
    %v242 = vmul.f32 %v241, 1.442695
    %v243 = vpow.pop %v242
    %v244 = vadd.f32 %v243, 1.0
    %v245 = vrcp.pop %v244
    %v246 = vmul.f32 %v244, %v245
    %v247 = vsub.f32 1.0, %v246
    %v248 = vmul.f32 %v245, %v247
    %v249 = vadd.f32 %v245, %v248
    %vm250 = vweird.f32 %v244
    %vm251 = vweird.f32 %v245
    %vm252 = vmor %vm250, %vm251
    %v253 = vsel %vm252, %v245, %v249
    %v254 = vand.u32 2147483647, %v244
    %vm255 = vcmp.eq.f32.partialorder %v254, 8.507059e+37
    %v256 = vand.u32 %v244, 2147483648
    %v257 = vor.u32 1.1754944e-38, %v256
    %v258 = vsel %vm255, %v257, %v253
    %v259 = vmul.f32 1.0, %v258
    %v260 = vtanh.pop %v240
    %v261 = vmul.f32 %v259, %v206
    %263 = vrot.lane.b32.xlu0 %v260, 64
    %v264 = vpop.permute.xlu0 %263
    %v266 = vmul.f32 %v259, %v264
    %268 = vrot.lane.b32.xlu0 %v266, 32
    %v269 = vpop.permute.xlu0 %268
    %v271 = vadd.f32 %v261, %v269
    %v272 = vtanh.pop %v271
    %274 = vrot.lane.b32.xlu0 %v272, 64
    %v275 = vpop.permute.xlu0 %274
    %v277 = vmul.f32 %v259, %v275
    %279 = vrot.lane.b32.xlu0 %v277, 32
    %v280 = vpop.permute.xlu0 %279
    %282 = vst.msk [vmem:[#allocation2 + $0x8] sm:$0xff] %vm147, %v280
    %v283 = vsel %vm147, %v280, 0
    %285 = vmatpush.msra.mxu0 0.0
    %286 = vmatpush.msra.mxu0 0.0
    %287 = vmatpush.msra.mxu0 0.0
    %288 = vmatpush.msra.mxu0 0.0
    %289 = vmatpush.msra.mxu0 0.0
    %290 = vmatpush.msra.mxu0 0.0
    %291 = vmatpush.msra.mxu0 0.0
    %292 = vmatpush.msra.mxu0 0.0
    %293 = vmatpush.msra.mxu0 0.0
    %294 = vmatpush.msra.mxu0 0.0
    %295 = vmatpush.msra.mxu0 0.0
    %296 = vmatpush.msra.mxu0 0.0
    %297 = vmatpush.msra.mxu0 %v144
    %298 = vmatpush.msra.mxu0 %v143
    %299 = vmatpush.msra.mxu0 %v142
    %300 = vmatpush.msra.mxu0 %v141
    %301 = vmatmul.f32.gmra.mxu0 %v283
    %v302 = vpop.f32.mrf.mxu0
    %v303 = vadd.f32 0.0, %v302
    %304 = vdwg.mxu0
    %v305 = vadd.f32 %v124, %v303
    %v306 = vxor.u32 %v305, 2147483648
    %v307 = vmul.f32 %v306, 1.442695
    %v308 = vpow.pop %v307
    %v309 = vadd.f32 %v308, 1.0
    %v310 = vrcp.pop %v309
    %v311 = vmul.f32 %v309, %v310
    %v312 = vsub.f32 1.0, %v311
    %v313 = vmul.f32 %v310, %v312
    %v314 = vadd.f32 %v310, %v313
    %vm315 = vweird.f32 %v309
    %vm316 = vweird.f32 %v310
    %vm317 = vmor %vm315, %vm316
    %v318 = vsel %vm317, %v310, %v314
    %v319 = vand.u32 2147483647, %v309
    %vm320 = vcmp.eq.f32.partialorder %v319, 8.507059e+37
    %v321 = vand.u32 %v309, 2147483648
    %v322 = vor.u32 1.1754944e-38, %v321
    %v323 = vsel %vm320, %v322, %v318
    %v324 = vmul.f32 1.0, %v323
    %v325 = vtanh.pop %v305
    %v326 = vmul.f32 %v324, %v271
    %328 = vrot.lane.b32.xlu0 %v325, 64
    %v329 = vpop.permute.xlu0 %328
    %v331 = vmul.f32 %v324, %v329
    %333 = vrot.lane.b32.xlu0 %v331, 32
    %v334 = vpop.permute.xlu0 %333
    %v336 = vadd.f32 %v326, %v334
    %v337 = vtanh.pop %v336
    %339 = vrot.lane.b32.xlu0 %v337, 64
    %v340 = vpop.permute.xlu0 %339
    %v342 = vmul.f32 %v324, %v340
    %344 = vrot.lane.b32.xlu0 %v342, 32
    %v345 = vpop.permute.xlu0 %344
    %347 = vst.msk [vmem:[#allocation2 + $0x10] sm:$0xff] %vm147, %v345
    %v348 = vsel %vm147, %v345, 0
    %350 = vmatpush.msra.mxu0 0.0
    %351 = vmatpush.msra.mxu0 0.0
    %352 = vmatpush.msra.mxu0 0.0
    %353 = vmatpush.msra.mxu0 0.0
    %354 = vmatpush.msra.mxu0 0.0
    %355 = vmatpush.msra.mxu0 0.0
    %356 = vmatpush.msra.mxu0 0.0
    %357 = vmatpush.msra.mxu0 0.0
    %358 = vmatpush.msra.mxu0 0.0
    %359 = vmatpush.msra.mxu0 0.0
    %360 = vmatpush.msra.mxu0 0.0
    %361 = vmatpush.msra.mxu0 0.0
    %362 = vmatpush.msra.mxu0 %v144
    %363 = vmatpush.msra.mxu0 %v143
    %364 = vmatpush.msra.mxu0 %v142
    %365 = vmatpush.msra.mxu0 %v141
    %366 = vmatmul.f32.gmra.mxu0 %v348
    %v367 = vpop.f32.mrf.mxu0
    %v368 = vadd.f32 0.0, %v367
    %369 = vdwg.mxu0
    %v370 = vadd.f32 %v127, %v368
    %v371 = vxor.u32 %v370, 2147483648
    %v372 = vmul.f32 %v371, 1.442695
    %v373 = vpow.pop %v372
    %v374 = vadd.f32 %v373, 1.0
    %v375 = vrcp.pop %v374
    %v376 = vmul.f32 %v374, %v375
    %v377 = vsub.f32 1.0, %v376
    %v378 = vmul.f32 %v375, %v377
    %v379 = vadd.f32 %v375, %v378
    %vm380 = vweird.f32 %v374
    %vm381 = vweird.f32 %v375
    %vm382 = vmor %vm380, %vm381
    %v383 = vsel %vm382, %v375, %v379
    %v384 = vand.u32 2147483647, %v374
    %vm385 = vcmp.eq.f32.partialorder %v384, 8.507059e+37
    %v386 = vand.u32 %v374, 2147483648
    %v387 = vor.u32 1.1754944e-38, %v386
    %v388 = vsel %vm385, %v387, %v383
    %v389 = vmul.f32 1.0, %v388
    %v390 = vtanh.pop %v370
    %v391 = vmul.f32 %v389, %v336
    %393 = vrot.lane.b32.xlu0 %v390, 64
    %v394 = vpop.permute.xlu0 %393
    %v396 = vmul.f32 %v389, %v394
    %398 = vrot.lane.b32.xlu0 %v396, 32
    %v399 = vpop.permute.xlu0 %398
    %v401 = vadd.f32 %v391, %v399
    %v402 = vtanh.pop %v401
    %404 = vrot.lane.b32.xlu0 %v402, 64
    %v405 = vpop.permute.xlu0 %404
    %v407 = vmul.f32 %v389, %v405
    %409 = vrot.lane.b32.xlu0 %v407, 32
    %v410 = vpop.permute.xlu0 %409
    %412 = vst.msk [vmem:[#allocation2 + $0x18] sm:$0xff] %vm147, %v410
    %v413 = vsel %vm147, %v410, 0
    %415 = vmatpush.msra.mxu0 0.0
    %416 = vmatpush.msra.mxu0 0.0
    %417 = vmatpush.msra.mxu0 0.0
    %418 = vmatpush.msra.mxu0 0.0
    %419 = vmatpush.msra.mxu0 0.0
    %420 = vmatpush.msra.mxu0 0.0
    %421 = vmatpush.msra.mxu0 0.0
    %422 = vmatpush.msra.mxu0 0.0
    %423 = vmatpush.msra.mxu0 0.0
    %424 = vmatpush.msra.mxu0 0.0
    %425 = vmatpush.msra.mxu0 0.0
    %426 = vmatpush.msra.mxu0 0.0
    %427 = vmatpush.msra.mxu0 %v144
    %428 = vmatpush.msra.mxu0 %v143
    %429 = vmatpush.msra.mxu0 %v142
    %430 = vmatpush.msra.mxu0 %v141
    %431 = vmatmul.f32.gmra.mxu0 %v413
    %v432 = vpop.f32.mrf.mxu0
    %v433 = vadd.f32 0.0, %v432
    %434 = vdwg.mxu0
    %v435 = vadd.f32 %v130, %v433
    %v436 = vxor.u32 %v435, 2147483648
    %v437 = vmul.f32 %v436, 1.442695
    %v438 = vpow.pop %v437
    %v439 = vadd.f32 %v438, 1.0
    %v440 = vrcp.pop %v439
    %v441 = vmul.f32 %v439, %v440
    %v442 = vsub.f32 1.0, %v441
    %v443 = vmul.f32 %v440, %v442
    %v444 = vadd.f32 %v440, %v443
    %vm445 = vweird.f32 %v439
    %vm446 = vweird.f32 %v440
    %vm447 = vmor %vm445, %vm446
    %v448 = vsel %vm447, %v440, %v444
    %v449 = vand.u32 2147483647, %v439
    %vm450 = vcmp.eq.f32.partialorder %v449, 8.507059e+37
    %v451 = vand.u32 %v439, 2147483648
    %v452 = vor.u32 1.1754944e-38, %v451
    %v453 = vsel %vm450, %v452, %v448
    %v454 = vmul.f32 1.0, %v453
    %v455 = vtanh.pop %v435
    %v456 = vmul.f32 %v454, %v401
    %458 = vrot.lane.b32.xlu0 %v455, 64
    %v459 = vpop.permute.xlu0 %458
    %v461 = vmul.f32 %v454, %v459
    %463 = vrot.lane.b32.xlu0 %v461, 32
    %v464 = vpop.permute.xlu0 %463
    %v466 = vadd.f32 %v456, %v464
    %v467 = vtanh.pop %v466
    %469 = vrot.lane.b32.xlu0 %v467, 64
    %v470 = vpop.permute.xlu0 %469
    %v472 = vmul.f32 %v454, %v470
    %474 = vrot.lane.b32.xlu0 %v472, 32
    %v475 = vpop.permute.xlu0 %474
    %477 = vst.msk [vmem:[#allocation2 + $0x20] sm:$0xff] %vm147, %v475
    %v478 = vsel %vm147, %v475, 0
    %480 = vmatpush.msra.mxu0 0.0
    %481 = vmatpush.msra.mxu0 0.0
    %482 = vmatpush.msra.mxu0 0.0
    %483 = vmatpush.msra.mxu0 0.0
    %484 = vmatpush.msra.mxu0 0.0
    %485 = vmatpush.msra.mxu0 0.0
    %486 = vmatpush.msra.mxu0 0.0
    %487 = vmatpush.msra.mxu0 0.0
    %488 = vmatpush.msra.mxu0 0.0
    %489 = vmatpush.msra.mxu0 0.0
    %490 = vmatpush.msra.mxu0 0.0
    %491 = vmatpush.msra.mxu0 0.0
    %492 = vmatpush.msra.mxu0 %v144
    %493 = vmatpush.msra.mxu0 %v143
    %494 = vmatpush.msra.mxu0 %v142
    %495 = vmatpush.msra.mxu0 %v141
    %496 = vmatmul.f32.gmra.mxu0 %v478
    %v497 = vpop.f32.mrf.mxu0
    %v498 = vadd.f32 0.0, %v497
    %499 = vdwg.mxu0
    %v500 = vadd.f32 %v133, %v498
    %v501 = vxor.u32 %v500, 2147483648
    %v502 = vmul.f32 %v501, 1.442695
    %v503 = vpow.pop %v502
    %v504 = vadd.f32 %v503, 1.0
    %v505 = vrcp.pop %v504
    %v506 = vmul.f32 %v504, %v505
    %v507 = vsub.f32 1.0, %v506
    %v508 = vmul.f32 %v505, %v507
    %v509 = vadd.f32 %v505, %v508
    %vm510 = vweird.f32 %v504
    %vm511 = vweird.f32 %v505
    %vm512 = vmor %vm510, %vm511
    %v513 = vsel %vm512, %v505, %v509
    %v514 = vand.u32 2147483647, %v504
    %vm515 = vcmp.eq.f32.partialorder %v514, 8.507059e+37
    %v516 = vand.u32 %v504, 2147483648
    %v517 = vor.u32 1.1754944e-38, %v516
    %v518 = vsel %vm515, %v517, %v513
    %v519 = vmul.f32 1.0, %v518
    %v520 = vtanh.pop %v500
    %v521 = vmul.f32 %v519, %v466
    %523 = vrot.lane.b32.xlu0 %v520, 64
    %v524 = vpop.permute.xlu0 %523
    %v526 = vmul.f32 %v519, %v524
    %528 = vrot.lane.b32.xlu0 %v526, 32
    %v529 = vpop.permute.xlu0 %528
    %v531 = vadd.f32 %v521, %v529
    %v532 = vtanh.pop %v531
    %534 = vrot.lane.b32.xlu0 %v532, 64
    %v535 = vpop.permute.xlu0 %534
    %v537 = vmul.f32 %v519, %v535
    %539 = vrot.lane.b32.xlu0 %v537, 32
    %v540 = vpop.permute.xlu0 %539
    %542 = vst.msk [vmem:[#allocation2 + $0x28] sm:$0xff] %vm147, %v540
    %v543 = vsel %vm147, %v540, 0
    %545 = vmatpush.msra.mxu0 0.0
    %546 = vmatpush.msra.mxu0 0.0
    %547 = vmatpush.msra.mxu0 0.0
    %548 = vmatpush.msra.mxu0 0.0
    %549 = vmatpush.msra.mxu0 0.0
    %550 = vmatpush.msra.mxu0 0.0
    %551 = vmatpush.msra.mxu0 0.0
    %552 = vmatpush.msra.mxu0 0.0
    %553 = vmatpush.msra.mxu0 0.0
    %554 = vmatpush.msra.mxu0 0.0
    %555 = vmatpush.msra.mxu0 0.0
    %556 = vmatpush.msra.mxu0 0.0
    %557 = vmatpush.msra.mxu0 %v144
    %558 = vmatpush.msra.mxu0 %v143
    %559 = vmatpush.msra.mxu0 %v142
    %560 = vmatpush.msra.mxu0 %v141
    %561 = vmatmul.f32.gmra.mxu0 %v543
    %v562 = vpop.f32.mrf.mxu0
    %v563 = vadd.f32 0.0, %v562
    %564 = vdwg.mxu0
    %v565 = vadd.f32 %v136, %v563
    %v566 = vxor.u32 %v565, 2147483648
    %v567 = vmul.f32 %v566, 1.442695
    %v568 = vpow.pop %v567
    %v569 = vadd.f32 %v568, 1.0
    %v570 = vrcp.pop %v569
    %v571 = vmul.f32 %v569, %v570
    %v572 = vsub.f32 1.0, %v571
    %v573 = vmul.f32 %v570, %v572
    %v574 = vadd.f32 %v570, %v573
    %vm575 = vweird.f32 %v569
    %vm576 = vweird.f32 %v570
    %vm577 = vmor %vm575, %vm576
    %v578 = vsel %vm577, %v570, %v574
    %v579 = vand.u32 2147483647, %v569
    %vm580 = vcmp.eq.f32.partialorder %v579, 8.507059e+37
    %v581 = vand.u32 %v569, 2147483648
    %v582 = vor.u32 1.1754944e-38, %v581
    %v583 = vsel %vm580, %v582, %v578
    %v584 = vmul.f32 1.0, %v583
    %v585 = vtanh.pop %v565
    %v586 = vmul.f32 %v584, %v531
    %588 = vrot.lane.b32.xlu0 %v585, 64
    %v589 = vpop.permute.xlu0 %588
    %v591 = vmul.f32 %v584, %v589
    %593 = vrot.lane.b32.xlu0 %v591, 32
    %v594 = vpop.permute.xlu0 %593
    %v596 = vadd.f32 %v586, %v594
    %v597 = vtanh.pop %v596
    %599 = vrot.lane.b32.xlu0 %v597, 64
    %v600 = vpop.permute.xlu0 %599
    %v602 = vmul.f32 %v584, %v600
    %604 = vrot.lane.b32.xlu0 %v602, 32
    %v605 = vpop.permute.xlu0 %604
    %607 = vst.msk [vmem:[#allocation2 + $0x30] sm:$0xff] %vm147, %v605
    %v608 = vsel %vm147, %v605, 0
    %610 = vmatpush.msra.mxu0 0.0
    %611 = vmatpush.msra.mxu0 0.0
    %612 = vmatpush.msra.mxu0 0.0
    %613 = vmatpush.msra.mxu0 0.0
    %614 = vmatpush.msra.mxu0 0.0
    %615 = vmatpush.msra.mxu0 0.0
    %616 = vmatpush.msra.mxu0 0.0
    %617 = vmatpush.msra.mxu0 0.0
    %618 = vmatpush.msra.mxu0 0.0
    %619 = vmatpush.msra.mxu0 0.0
    %620 = vmatpush.msra.mxu0 0.0
    %621 = vmatpush.msra.mxu0 0.0
    %622 = vmatpush.msra.mxu0 %v144
    %623 = vmatpush.msra.mxu0 %v143
    %624 = vmatpush.msra.mxu0 %v142
    %625 = vmatpush.msra.mxu0 %v141
    %626 = vmatmul.f32.gmra.mxu0 %v608
    %v627 = vpop.f32.mrf.mxu0
    %v628 = vadd.f32 0.0, %v627
    %629 = vdwg.mxu0
    %v630 = vadd.f32 %v139, %v628
    %v631 = vxor.u32 %v630, 2147483648
    %v632 = vmul.f32 %v631, 1.442695
    %v633 = vpow.pop %v632
    %v634 = vadd.f32 %v633, 1.0
    %v635 = vrcp.pop %v634
    %v636 = vmul.f32 %v634, %v635
    %v637 = vsub.f32 1.0, %v636
    %v638 = vmul.f32 %v635, %v637
    %v639 = vadd.f32 %v635, %v638
    %vm640 = vweird.f32 %v634
    %vm641 = vweird.f32 %v635
    %vm642 = vmor %vm640, %vm641
    %v643 = vsel %vm642, %v635, %v639
    %v644 = vand.u32 2147483647, %v634
    %vm645 = vcmp.eq.f32.partialorder %v644, 8.507059e+37
    %v646 = vand.u32 %v634, 2147483648
    %v647 = vor.u32 1.1754944e-38, %v646
    %v648 = vsel %vm645, %v647, %v643
    %v649 = vmul.f32 1.0, %v648
    %v650 = vtanh.pop %v630
    %v651 = vmul.f32 %v649, %v596
    %653 = vrot.lane.b32.xlu0 %v650, 64
    %v654 = vpop.permute.xlu0 %653
    %v656 = vmul.f32 %v649, %v654
    %658 = vrot.lane.b32.xlu0 %v656, 32
    %v659 = vpop.permute.xlu0 %658
    %v661 = vadd.f32 %v651, %v659
    %v662 = vtanh.pop %v661
    %664 = vrot.lane.b32.xlu0 %v662, 64
    %v665 = vpop.permute.xlu0 %664
    %v667 = vmul.f32 %v649, %v665
    %669 = vrot.lane.b32.xlu0 %v667, 32
    %v670 = vpop.permute.xlu0 %669
    %672 = vst.msk [vmem:[#allocation2 + $0x38] sm:$0xff] %vm147, %v670
    %673 = vst.msk [vmem:[#allocation9] sm:$0xff] %vm147, %v670
    %675 = vrot.lane.b32.xlu0 %v661, 96
    %v676 = vpop.permute.xlu0 %675
    %678 = vst.msk [vmem:[#allocation11] sm:$0xff] %vm147, %v676
    %v679 = vld [vmem:[#allocation2] sm:$0xff]
    %v680 = vld [vmem:[#allocation2 + $0x8] sm:$0xff]
    %v681 = vld [vmem:[#allocation2 + $0x10] sm:$0xff]
    %v682 = vld [vmem:[#allocation2 + $0x18] sm:$0xff]
    %v683 = vld [vmem:[#allocation2 + $0x20] sm:$0xff]
    %v684 = vld [vmem:[#allocation2 + $0x28] sm:$0xff]
    %v685 = vld [vmem:[#allocation2 + $0x30] sm:$0xff]
    %v686 = vld [vmem:[#allocation2 + $0x38] sm:$0xff]
    %v687 = vld [vmem:[%s4] sm:$0xff]
    %v688 = vld [vmem:[%s4 + $0x8] sm:$0xff]
    %v689 = vld [vmem:[%s4 + $0x10] sm:$0xff]
    %v690 = vld [vmem:[%s4 + $0x18] sm:$0xff]
    %v691 = vld [vmem:[%s5] sm:$0x1]
    %v693 = vperm.slane %v691, 0
    %v696 = vsel %vm147, %v679, 0
    %v699 = vsel %vm147, %v680, 0
    %v702 = vsel %vm147, %v681, 0
    %v705 = vsel %vm147, %v682, 0
    %v708 = vsel %vm147, %v683, 0
    %v711 = vsel %vm147, %v684, 0
    %v714 = vsel %vm147, %v685, 0
    %v717 = vsel %vm147, %v686, 0
    %719 = vmatpush.msra.mxu0 0.0
    %720 = vmatpush.msra.mxu0 0.0
    %721 = vmatpush.msra.mxu0 0.0
    %722 = vmatpush.msra.mxu0 0.0
    %723 = vmatpush.msra.mxu0 0.0
    %724 = vmatpush.msra.mxu0 0.0
    %725 = vmatpush.msra.mxu0 0.0
    %726 = vmatpush.msra.mxu0 0.0
    %727 = vmatpush.msra.mxu0 0.0
    %728 = vmatpush.msra.mxu0 0.0
    %729 = vmatpush.msra.mxu0 0.0
    %730 = vmatpush.msra.mxu0 0.0
    %731 = vmatpush.msra.mxu0 %v690
    %732 = vmatpush.msra.mxu0 %v689
    %733 = vmatpush.msra.mxu0 %v688
    %734 = vmatpush.msra.mxu0 %v687
    %735 = vmatmul.f32.gmra.mxu0 %v696
    %v736 = vpop.f32.mrf.mxu0
    %v737 = vadd.f32 %v693, %v736
    %738 = vmatmul.f32.gmra.mxu0 %v699
    %v739 = vpop.f32.mrf.mxu0
    %v740 = vadd.f32 %v693, %v739
    %741 = vmatmul.f32.gmra.mxu0 %v702
    %v742 = vpop.f32.mrf.mxu0
    %v743 = vadd.f32 %v693, %v742
    %744 = vmatmul.f32.gmra.mxu0 %v705
    %v745 = vpop.f32.mrf.mxu0
    %v746 = vadd.f32 %v693, %v745
    %747 = vmatmul.f32.gmra.mxu0 %v708
    %v748 = vpop.f32.mrf.mxu0
    %v749 = vadd.f32 %v693, %v748
    %750 = vmatmul.f32.gmra.mxu0 %v711
    %v751 = vpop.f32.mrf.mxu0
    %v752 = vadd.f32 %v693, %v751
    %753 = vmatmul.f32.gmra.mxu0 %v714
    %v754 = vpop.f32.mrf.mxu0
    %v755 = vadd.f32 %v693, %v754
    %756 = vmatmul.f32.gmra.mxu0 %v717
    %v757 = vpop.f32.mrf.mxu0
    %v758 = vadd.f32 %v693, %v757
    %759 = vdwg.mxu0
    %v760 = vxor.u32 %v737, 2147483648
    %v761 = vxor.u32 %v740, 2147483648
    %v762 = vxor.u32 %v743, 2147483648
    %v763 = vxor.u32 %v746, 2147483648
    %v764 = vxor.u32 %v749, 2147483648
    %v765 = vxor.u32 %v752, 2147483648
    %v766 = vxor.u32 %v755, 2147483648
    %v767 = vxor.u32 %v758, 2147483648
    %v768 = vmul.f32 %v760, 1.442695
    %v769 = vpow.pop %v768
    %v770 = vmul.f32 %v761, 1.442695
    %v771 = vpow.pop %v770
    %v772 = vmul.f32 %v762, 1.442695
    %v773 = vpow.pop %v772
    %v774 = vmul.f32 %v763, 1.442695
    %v775 = vpow.pop %v774
    %v776 = vmul.f32 %v764, 1.442695
    %v777 = vpow.pop %v776
    %v778 = vmul.f32 %v765, 1.442695
    %v779 = vpow.pop %v778
    %v780 = vmul.f32 %v766, 1.442695
    %v781 = vpow.pop %v780
    %v782 = vmul.f32 %v767, 1.442695
    %v783 = vpow.pop %v782
    %v784 = vadd.f32 %v769, 1.0
    %v785 = vadd.f32 %v771, 1.0
    %v786 = vadd.f32 %v773, 1.0
    %v787 = vadd.f32 %v775, 1.0
    %v788 = vadd.f32 %v777, 1.0
    %v789 = vadd.f32 %v779, 1.0
    %v790 = vadd.f32 %v781, 1.0
    %v791 = vadd.f32 %v783, 1.0
    %v792 = vrcp.pop %v784
    %v793 = vmul.f32 %v784, %v792
    %v794 = vsub.f32 1.0, %v793
    %v795 = vmul.f32 %v792, %v794
    %v796 = vadd.f32 %v792, %v795
    %vm797 = vweird.f32 %v784
    %vm798 = vweird.f32 %v792
    %vm799 = vmor %vm797, %vm798
    %v800 = vsel %vm799, %v792, %v796
    %v801 = vand.u32 2147483647, %v784
    %vm802 = vcmp.eq.f32.partialorder %v801, 8.507059e+37
    %v803 = vand.u32 %v784, 2147483648
    %v804 = vor.u32 1.1754944e-38, %v803
    %v805 = vsel %vm802, %v804, %v800
    %v806 = vmul.f32 1.0, %v805
    %v807 = vrcp.pop %v785
    %v808 = vmul.f32 %v785, %v807
    %v809 = vsub.f32 1.0, %v808
    %v810 = vmul.f32 %v807, %v809
    %v811 = vadd.f32 %v807, %v810
    %vm812 = vweird.f32 %v785
    %vm813 = vweird.f32 %v807
    %vm814 = vmor %vm812, %vm813
    %v815 = vsel %vm814, %v807, %v811
    %v816 = vand.u32 2147483647, %v785
    %vm817 = vcmp.eq.f32.partialorder %v816, 8.507059e+37
    %v818 = vand.u32 %v785, 2147483648
    %v819 = vor.u32 1.1754944e-38, %v818
    %v820 = vsel %vm817, %v819, %v815
    %v821 = vmul.f32 1.0, %v820
    %v822 = vrcp.pop %v786
    %v823 = vmul.f32 %v786, %v822
    %v824 = vsub.f32 1.0, %v823
    %v825 = vmul.f32 %v822, %v824
    %v826 = vadd.f32 %v822, %v825
    %vm827 = vweird.f32 %v786
    %vm828 = vweird.f32 %v822
    %vm829 = vmor %vm827, %vm828
    %v830 = vsel %vm829, %v822, %v826
    %v831 = vand.u32 2147483647, %v786
    %vm832 = vcmp.eq.f32.partialorder %v831, 8.507059e+37
    %v833 = vand.u32 %v786, 2147483648
    %v834 = vor.u32 1.1754944e-38, %v833
    %v835 = vsel %vm832, %v834, %v830
    %v836 = vmul.f32 1.0, %v835
    %v837 = vrcp.pop %v787
    %v838 = vmul.f32 %v787, %v837
    %v839 = vsub.f32 1.0, %v838
    %v840 = vmul.f32 %v837, %v839
    %v841 = vadd.f32 %v837, %v840
    %vm842 = vweird.f32 %v787
    %vm843 = vweird.f32 %v837
    %vm844 = vmor %vm842, %vm843
    %v845 = vsel %vm844, %v837, %v841
    %v846 = vand.u32 2147483647, %v787
    %vm847 = vcmp.eq.f32.partialorder %v846, 8.507059e+37
    %v848 = vand.u32 %v787, 2147483648
    %v849 = vor.u32 1.1754944e-38, %v848
    %v850 = vsel %vm847, %v849, %v845
    %v851 = vmul.f32 1.0, %v850
    %v852 = vrcp.pop %v788
    %v853 = vmul.f32 %v788, %v852
    %v854 = vsub.f32 1.0, %v853
    %v855 = vmul.f32 %v852, %v854
    %v856 = vadd.f32 %v852, %v855
    %vm857 = vweird.f32 %v788
    %vm858 = vweird.f32 %v852
    %vm859 = vmor %vm857, %vm858
    %v860 = vsel %vm859, %v852, %v856
    %v861 = vand.u32 2147483647, %v788
    %vm862 = vcmp.eq.f32.partialorder %v861, 8.507059e+37
    %v863 = vand.u32 %v788, 2147483648
    %v864 = vor.u32 1.1754944e-38, %v863
    %v865 = vsel %vm862, %v864, %v860
    %v866 = vmul.f32 1.0, %v865
    %v867 = vrcp.pop %v789
    %v868 = vmul.f32 %v789, %v867
    %v869 = vsub.f32 1.0, %v868
    %v870 = vmul.f32 %v867, %v869
    %v871 = vadd.f32 %v867, %v870
    %vm872 = vweird.f32 %v789
    %vm873 = vweird.f32 %v867
    %vm874 = vmor %vm872, %vm873
    %v875 = vsel %vm874, %v867, %v871
    %v876 = vand.u32 2147483647, %v789
    %vm877 = vcmp.eq.f32.partialorder %v876, 8.507059e+37
    %v878 = vand.u32 %v789, 2147483648
    %v879 = vor.u32 1.1754944e-38, %v878
    %v880 = vsel %vm877, %v879, %v875
    %v881 = vmul.f32 1.0, %v880
    %v882 = vrcp.pop %v790
    %v883 = vmul.f32 %v790, %v882
    %v884 = vsub.f32 1.0, %v883
    %v885 = vmul.f32 %v882, %v884
    %v886 = vadd.f32 %v882, %v885
    %vm887 = vweird.f32 %v790
    %vm888 = vweird.f32 %v882
    %vm889 = vmor %vm887, %vm888
    %v890 = vsel %vm889, %v882, %v886
    %v891 = vand.u32 2147483647, %v790
    %vm892 = vcmp.eq.f32.partialorder %v891, 8.507059e+37
    %v893 = vand.u32 %v790, 2147483648
    %v894 = vor.u32 1.1754944e-38, %v893
    %v895 = vsel %vm892, %v894, %v890
    %v896 = vmul.f32 1.0, %v895
    %v897 = vrcp.pop %v791
    %v898 = vmul.f32 %v791, %v897
    %v899 = vsub.f32 1.0, %v898
    %v900 = vmul.f32 %v897, %v899
    %v901 = vadd.f32 %v897, %v900
    %vm902 = vweird.f32 %v791
    %vm903 = vweird.f32 %v897
    %vm904 = vmor %vm902, %vm903
    %v905 = vsel %vm904, %v897, %v901
    %v906 = vand.u32 2147483647, %v791
    %vm907 = vcmp.eq.f32.partialorder %v906, 8.507059e+37
    %v908 = vand.u32 %v791, 2147483648
    %v909 = vor.u32 1.1754944e-38, %v908
    %v910 = vsel %vm907, %v909, %v905
    %v911 = vmul.f32 1.0, %v910
    %912 = vst [vmem:[#allocation8] sm:$0xff] %v806
    %913 = vst [vmem:[#allocation8 + $0x8] sm:$0xff] %v821
    %914 = vst [vmem:[#allocation8 + $0x10] sm:$0xff] %v836
    %915 = vst [vmem:[#allocation8 + $0x18] sm:$0xff] %v851
    %916 = vst [vmem:[#allocation8 + $0x20] sm:$0xff] %v866
    %917 = vst [vmem:[#allocation8 + $0x28] sm:$0xff] %v881
    %918 = vst [vmem:[#allocation8 + $0x30] sm:$0xff] %v896
    %919 = vst [vmem:[#allocation8 + $0x38] sm:$0xff] %v911
    // Predicated region
    $region42: #{tpu_custom_call.1} parent=1 // pred_check
      _
    $region43: #{tpu_custom_call.1} parent=1 // pred_check_branch
      %921 = sbr.rel (0) target = $region45
    $region44: #{tpu_custom_call.1} parent=1 // pred_region
      %923 = vsyncadd [#allocation5], 0
      %s924 = sshll.u32 [#allocation8], 4
      %s925 = int_to_ptr.vmem [resolvable:$true] %s924
      %s926 = sshll.u32 %s8, 4
      %s927 = int_to_ptr.hbm [resolvable:$true] %s926
      %932 = dma.vmem_to_hbm [thread:$0]  %s925, 1024, %s927, [#allocation5], 128, 128, 8
    $region45: #{tpu_custom_call.1} parent=1 // pred_fallthru
      _
    // Predicated region
    $region46: #{tpu_custom_call.1} parent=1 // pred_check
      _
    $region47: #{tpu_custom_call.1} parent=1 // pred_check_branch
      %934 = sbr.rel (0) target = $region49
    $region48: #{tpu_custom_call.1} parent=1 // pred_region
      %936 = vsyncadd [#allocation10], 0
      %s938 = sshll.u32 [#allocation9], 4
      %s939 = int_to_ptr.vmem [resolvable:$true] %s938
      %s940 = sshll.u32 %s9, 4
      %s941 = int_to_ptr.hbm [resolvable:$true] %s940
      %943 = dma.vmem_to_hbm [thread:$0]  %s939, 128, %s941, [#allocation10]
    $region49: #{tpu_custom_call.1} parent=1 // pred_fallthru
      _
    // Predicated region
    $region50: #{tpu_custom_call.1} parent=1 // pred_check
      _
    $region51: #{tpu_custom_call.1} parent=1 // pred_check_branch
      %945 = sbr.rel (0) target = $region53
    $region52: #{tpu_custom_call.1} parent=1 // pred_region
      %947 = vsyncadd [#allocation10], 0
      %s949 = sshll.u32 [#allocation11], 4
      %s950 = int_to_ptr.vmem [resolvable:$true] %s949
      %s951 = sshll.u32 %s10, 4
      %s952 = int_to_ptr.hbm [resolvable:$true] %s951
      %954 = dma.vmem_to_hbm [thread:$0]  %s950, 128, %s952, [#allocation10]
    $region53: #{tpu_custom_call.1} parent=1 // pred_fallthru
      _
    // Predicated region
    $region54: #{tpu_custom_call.1} parent=1 // pred_check
      _
    $region55: #{tpu_custom_call.1} parent=1 // pred_check_branch
      %956 = sbr.rel (0) target = $region57
    $region56: #{tpu_custom_call.1} parent=1 // pred_region
      %958 = dma.done [#allocation5], 1024
    $region57: #{tpu_custom_call.1} parent=1 // pred_fallthru
      _
    // Predicated region
    $region58: #{tpu_custom_call.1} parent=1 // pred_check
      _
    $region59: #{tpu_custom_call.1} parent=1 // pred_check_branch
      %960 = sbr.rel (0) target = $region61
    $region60: #{tpu_custom_call.1} parent=1 // pred_region
      %962 = dma.done [#allocation10], 128
    $region61: #{tpu_custom_call.1} parent=1 // pred_fallthru
      _
    // Predicated region
    $region62: #{tpu_custom_call.1} parent=1 // pred_check
      _
    $region63: #{tpu_custom_call.1} parent=1 // pred_check_branch
      %964 = sbr.rel (0) target = $region65
    $region64: #{tpu_custom_call.1} parent=1 // pred_region
      %966 = dma.done [#allocation10], 128
    $region65: #{tpu_custom_call.1} parent=1 // pred_fallthru
      _
    %967 = vsyncpa [#allocation4], 1
    %968 = vsyncpa [#allocation7], 1
    %969 = vsyncpa [#allocation5], 1
    %970 = vsyncpa [#allocation10], 1

</llo_original>
